<compile_context>
chip_gen: v7x
topology: tpu7x:2x2x1
jax: 0.10.0
libtpu: 0.0.40
codegen_flags: <defaults>
</compile_context>

<pallas_src>
import jax
import jax.numpy as jnp
from jax.experimental import pallas as pl
from jax.experimental.pallas import tpu as pltpu


def bbcdr_kernel(x_ref, w1_ref, wblk_ref, o_ref):
    # x_ref:    (Bt, L, F*R)  natural-order x tile, lane-dense last dim
    # w1_ref:   (Bt, L, 1)    per-(batch, l) weights; broadcasts along lanes
    # wblk_ref: (F*R, F*O)    grid-invariant block-diagonal weight (f32)
    # o_ref:    (Bt, F*O)     lane-dense output slab (full extent, unpadded)
    xw = x_ref[...].astype(jnp.float32) * w1_ref[...].astype(jnp.float32)
    arg1 = jnp.sum(xw, axis=1)                              # (Bt, F*R) VPU L-sum
    out = jnp.dot(arg1, wblk_ref[...].astype(jnp.float32),
                  preferred_element_type=jnp.float32)       # MXU, K = F*R
    o_ref[...] = out.astype(o_ref.dtype)


def prepare_cdr_weight(cdr_weight, F, *, dtype=jnp.float32):
    """One-time (module __init__) weight prep — hoist out of the per-call path.

    Builds the F-block-diagonal, pre-transposed MXU RHS
        wblk[f*R + r, g*O + o] = cdr_weight[o, r] if f == g else 0
    so that (arg1 laid out as (B, F*R)) @ wblk  ==  F.linear(arg1, cdr_weight)
    laid out as (B, F*O).  Size is F*F*R*O elements — small for this module's
    F; for very large F one would tile over F instead.
    """
    del_o, del_r = cdr_weight.shape  # (O, R)
    return jnp.kron(jnp.eye(F, dtype=dtype), cdr_weight.T.astype(dtype))


def _round_up(a, m):
    return -(-a // m) * m


def _tile_vmem_bytes(bt, L, FR, FO, x_isz, o_isz):
    # Minor-two dims of each VMEM tile are padded to (8, 128) by Mosaic.
    x_t = bt * _round_up(L, 8) * _round_up(FR, 128) * x_isz
    w1_t = bt * _round_up(L, 8) * 128 * 4                    # (bt, L, 1) block
    o_t = _round_up(bt, 8) * _round_up(FO, 128) * o_isz
    return x_t + w1_t + o_t


def _pick_bt(B, per_batch_bytes, L, FR, FO, x_isz, o_isz, *,
             target_step_bytes=1 << 20, min_split_bytes=512 << 10,
             vmem_tile_budget=12 << 20):
    """Batch-tile size: ~1 MiB of x per grid step, multiple of 8 (output block
    second-minor constraint), >= 2 grid steps once the problem is large enough
    for v7x megacore sharding to matter, whole-B single step for tiny problems."""
    if B < 16 or B * per_batch_bytes < 2 * min_split_bytes:
        bt = B                          # tiny problem: splitting is pure overhead
    else:
        bt = max(8, target_step_bytes // per_batch_bytes)
        bt = min(bt, B // 2)            # >= 2 steps -> both v7x TensorCores busy
        bt = max(8, (bt // 8) * 8)
    # Keep double-buffered tiles comfortably inside VMEM on every chip.
    while bt > 8 and 2 * _tile_vmem_bytes(bt, L, FR, FO, x_isz, o_isz) > vmem_tile_budget:
        bt = max(8, ((bt // 2) // 8) * 8)
    return int(bt)


def bbcdr_net(x, arg1_weight, cdr_weight=None, *, cdr_wblk=None):
    """x: (B, L, F, R), arg1_weight: (B, L), cdr_weight: (O, R) -> (B, F, O).

    Pass cdr_wblk=prepare_cdr_weight(cdr_weight, F) to hoist the weight prep to
    module-init time; otherwise it is built here on every call.
    """
    B, L, F, R = x.shape
    if cdr_wblk is None:
        cdr_wblk = prepare_cdr_weight(cdr_weight, F)   # hoist in real use
    FR = F * R
    FO = cdr_wblk.shape[1]
    O = FO // F
    assert cdr_wblk.shape == (FR, FO), cdr_wblk.shape

    w_dtype = cdr_weight.dtype if cdr_weight is not None else cdr_wblk.dtype
    out_dtype = jnp.result_type(x.dtype, arg1_weight.dtype, w_dtype)

    x_isz = jnp.dtype(x.dtype).itemsize
    o_isz = jnp.dtype(out_dtype).itemsize
    per_batch_bytes = L * FR * x_isz

    Bt = _pick_bt(B, per_batch_bytes, L, FR, FO, x_isz, o_isz)
    grid = (pl.cdiv(B, Bt),)

    # Explicit VMEM limit derived from the actual tile footprint.
    wblk_bytes = (_round_up(FR, 8) * _round_up(FO, 128)
                  * jnp.dtype(cdr_wblk.dtype).itemsize)
    need = 2 * _tile_vmem_bytes(Bt, L, FR, FO, x_isz, o_isz) + 2 * wblk_bytes
    vmem_limit = int(min(max(2 * need + (2 << 20), 16 << 20), 64 << 20))

    flops = int(2 * B * L * FR + 2 * B * FR * FO)
    bytes_accessed = int(
        x.size * x_isz
        + arg1_weight.size * jnp.dtype(arg1_weight.dtype).itemsize
        + cdr_wblk.size * jnp.dtype(cdr_wblk.dtype).itemsize
        + B * FO * o_isz)

    # Wrapper-side layout plumbing is all free (contiguous reshapes only).
    x2 = x.reshape(B, L, FR)
    w1_3 = arg1_weight.reshape(B, L, 1)

    out2d = pl.pallas_call(
        bbcdr_kernel,
        out_shape=jax.ShapeDtypeStruct((B, FO), out_dtype),
        grid_spec=pltpu.PrefetchScalarGridSpec(
            num_scalar_prefetch=0,
            grid=grid,
            in_specs=[
                pl.BlockSpec((Bt, L, FR), lambda i: (i, 0, 0)),
                pl.BlockSpec((Bt, L, 1), lambda i: (i, 0, 0)),
                pl.BlockSpec((FR, FO), lambda i: (0, 0)),   # grid-invariant weight
            ],
            out_specs=pl.BlockSpec((Bt, FO), lambda i: (i, 0)),
        ),
        compiler_params=pltpu.CompilerParams(
            dimension_semantics=("parallel",),
            vmem_limit_bytes=vmem_limit,
        ),
        cost_estimate=pl.CostEstimate(
            flops=flops, transcendentals=0, bytes_accessed=bytes_accessed),
    )(x2, w1_3, cdr_wblk)

    # Free contiguous reshape back to the module's (B, F, O) output shape.
    return out2d.reshape(B, F, O)


if __name__ == "__main__":
    # Small shapes consistent with the module's forward pass.
    B, L, F, R, O = 2, 4, 8, 16, 32

    key = jax.random.PRNGKey(0)
    kx, kw1, kcdr = jax.random.split(key, 3)
    x = jax.random.normal(kx, (B, L, F, R), dtype=jnp.float32)
    arg1_weight = jax.random.normal(kw1, (B, L), dtype=jnp.float32)
    # Deterministic "D_1" parameter (the module's self.cdr_weight), shape (O, R).
    cdr_weight = jax.random.normal(kcdr, (O, R), dtype=jnp.float32)

    # One-time weight prep (module __init__), reused across forward calls.
    cdr_wblk = prepare_cdr_weight(cdr_weight, F)

    fwd = jax.jit(lambda xx, ww, wb: bbcdr_net(xx, ww, cdr_wblk=wb))
    out = jax.block_until_ready(fwd(x, arg1_weight, cdr_wblk))

    # Pure-JAX reference for correctness.
    arg1_ref = jnp.einsum("blfr,bl->bfr", x, arg1_weight)
    ref = jnp.einsum("bfr,or->bfo", arg1_ref, cdr_weight)
    assert out.shape == (B, F, O), out.shape
    assert jnp.allclose(out, ref, atol=1e-4, rtol=1e-4), (
        float(jnp.max(jnp.abs(out - ref))))

    print("KERNEL_OK")
</pallas_src>

<mosaic_0001>
module attributes {stable_mosaic.version = 11 : i64} {
  func.func @bbcdr_kernel(%arg0: i32, %arg1: memref<2x4x128xf32, #tpu.memory_space<vmem>>, %arg2: memref<2x4x1xf32, #tpu.memory_space<vmem>>, %arg3: memref<128x256xf32, #tpu.memory_space<vmem>>, %arg4: memref<2x256xf32, #tpu.memory_space<vmem>>) attributes {dimension_semantics = [#tpu.dimension_semantics<parallel>], iteration_bounds = array<i64: 1>, scalar_prefetch = 0 : i64, scratch_operands = 0 : i64, tpu.core_type = #tpu.core_type<tc>, window_params = [{transform_indices = @transform_0, window_bounds = array<i64: 2, 4, 128>}, {transform_indices = @transform_1, window_bounds = array<i64: 2, 4, 1>}, {pipeline_mode = #tpu.pipeline_mode<synchronous>, transform_indices = @transform_2, window_bounds = array<i64: 128, 256>}, {transform_indices = @transform_3, window_bounds = array<i64: 2, 256>}]} {
    %c0 = arith.constant 0 : index
    %c0_0 = arith.constant 0 : index
    %c0_1 = arith.constant 0 : index
    %0 = vector.load %arg1[%c0, %c0_0, %c0_1] : memref<2x4x128xf32, #tpu.memory_space<vmem>>, vector<2x4x128xf32>
    %c0_2 = arith.constant 0 : index
    %c0_3 = arith.constant 0 : index
    %c0_4 = arith.constant 0 : index
    %1 = vector.load %arg2[%c0_2, %c0_3, %c0_4] : memref<2x4x1xf32, #tpu.memory_space<vmem>>, vector<2x4x1xf32>
    %2 = vector.broadcast %1 : vector<2x4x1xf32> to vector<2x4x128xf32>
    %3 = arith.mulf %0, %2 : vector<2x4x128xf32>
    %cst = arith.constant dense<0.000000e+00> : vector<2x128xf32>
    %4 = vector.multi_reduction <add>, %3, %cst [1] : vector<2x4x128xf32> to vector<2x128xf32>
    %c0_5 = arith.constant 0 : index
    %c0_6 = arith.constant 0 : index
    %5 = vector.load %arg3[%c0_5, %c0_6] : memref<128x256xf32, #tpu.memory_space<vmem>>, vector<128x256xf32>
    %cst_7 = arith.constant dense<0.000000e+00> : vector<2x256xf32>
    %6 = tpu.matmul %4, %5, %cst_7 {dimension_numbers = #tpu.dot_dimension_numbers<[1], [0], [0], [1], [0, 0, 1, 1], [], []>} : vector<2x128xf32>, vector<128x256xf32>, vector<2x256xf32> -> vector<2x256xf32>
    %c0_8 = arith.constant 0 : index
    %c0_9 = arith.constant 0 : index
    %7 = vector.load %arg4[%c0_8, %c0_9] : memref<2x256xf32, #tpu.memory_space<vmem>>, vector<2x256xf32>
    tpu.vector_store %arg4[%c0_8, %c0_9], %6 {strides = array<i32>} : memref<2x256xf32, #tpu.memory_space<vmem>>, vector<2x256xf32>,
    return
  }
  func.func @transform_0(%arg0: i32) -> (i32, i32, i32) {
    %c0_i32 = arith.constant 0 : i32
    %c0_i32_0 = arith.constant 0 : i32
    %c0_i32_1 = arith.constant 0 : i32
    return %arg0, %c0_i32, %c0_i32_0 : i32, i32, i32
  }
  func.func @transform_1(%arg0: i32) -> (i32, i32, i32) {
    %c0_i32 = arith.constant 0 : i32
    %c0_i32_0 = arith.constant 0 : i32
    %c0_i32_1 = arith.constant 0 : i32
    return %arg0, %c0_i32, %c0_i32_0 : i32, i32, i32
  }
  func.func @transform_2(%arg0: i32) -> (i32, i32) {
    %c0_i32 = arith.constant 0 : i32
    %c0_i32_0 = arith.constant 0 : i32
    %c0_i32_1 = arith.constant 0 : i32
    return %c0_i32, %c0_i32_0 : i32, i32
  }
  func.func @transform_3(%arg0: i32) -> (i32, i32) {
    %c0_i32 = arith.constant 0 : i32
    %c0_i32_0 = arith.constant 0 : i32
    return %arg0, %c0_i32 : i32, i32
  }
}

</mosaic_0001>

<llo_original>
// kernel: _lambda_.1
$region0: #{_lambda_.1}
  #allocation0 [shape = 'u32[]', space=smem, size = 0x4, offset = 0x4, fixed_abs, tag = 'smem constant byte address 0x4 - core index']
  #allocation1 [shape = 'u32[144,128]{1,0:T(1,128)}', space=vmem, size = 0x12000, scoped, tag = 'internal scratch']
  %s0 = inlined_call_operand.vmem [shape: f32[2,4,128], index: 0, kind: input, shape index: {}]
  %s1 = inlined_call_operand.vmem [shape: f32[2,4,1], index: 1, kind: input, shape index: {}]
  %s2 = inlined_call_operand.hbm [shape: f32[128,256], index: 2, kind: input, shape index: {}]
  %s3 = inlined_call_operand.vmem [shape: f32[2,256], index: 3, kind: output, shape index: {}]
  %s4 = sld [smem:[#allocation0]]
  $region26: #{_lambda_.1} parent=0
    _
  %s6 = ssub.s32 1, %s4
  %s7 = scalar_select 0, %s6, %s4
  $region1: #{_lambda_.1} parent=0
    #allocation2 [shape = 'u8[131072]{0}', space=vmem, size = 0x20000, scoped, tag = 'input window, operand 2, single buffered']
    #allocation3 [shape = 's32[1]{0}', space=sflag, size = 0x4, scoped, tag = 'scoped memory for _lambda_.1']
    %8 = vsyncpa [#allocation3], 0
    // Predicated region
    $region2: #{_lambda_.1} parent=1 // pred_check
      _
    $region3: #{_lambda_.1} parent=1 // pred_check_branch
      %10 = sbr.rel (0) target = $region5
    $region4: #{_lambda_.1} parent=1 // pred_region
      _
    $region5: #{_lambda_.1} parent=1 // pred_fallthru
      _
    // Predicated region
    $region6: #{_lambda_.1} parent=1 // pred_check
      _
    $region7: #{_lambda_.1} parent=1 // pred_check_branch
      %12 = sbr.rel (0) target = $region9
    $region8: #{_lambda_.1} parent=1 // pred_region
      _
    $region9: #{_lambda_.1} parent=1 // pred_fallthru
      _
    // Predicated region
    $region10: #{_lambda_.1} parent=1 // pred_check
      _
    $region11: #{_lambda_.1} parent=1 // pred_check_branch
      %14 = sbr.rel (0) target = $region13
    $region12: #{_lambda_.1} parent=1 // pred_region
      %s16 = ssub.s32 4096, 4096
      %17 = vsyncadd [#allocation3], %s16
      %s18 = sshll.u32 [#allocation2], 4
      %s19 = int_to_ptr.vmem [resolvable:$true] %s18
      %24 = dma.hbm_to_vmem [thread:$0]  %s2, 4096, %s19, [#allocation3], 256, 256, 16
    $region13: #{_lambda_.1} parent=1 // pred_fallthru
      _
    // Predicated region
    $region14: #{_lambda_.1} parent=1 // pred_check
      _
    $region15: #{_lambda_.1} parent=1 // pred_check_branch
      %26 = sbr.rel (0) target = $region17
    $region16: #{_lambda_.1} parent=1 // pred_region
      %27 = dma.done [#allocation3], 4096
    $region17: #{_lambda_.1} parent=1 // pred_fallthru
      _
    %v28 = vld [vmem:[%s0] sm:$0xf]
    %v29 = vld [vmem:[%s0 + $0x4] sm:$0xf]
    %v30 = vld [vmem:[%s1] sm:$0xf]
    %v31 = vld [vmem:[%s1 + $0x4] sm:$0xf]
    %33 = vset.pattern.permute.xlu0 0
    %34 = vperm.xlu0 %33, %v30
    %v35 = vpop.permute.xlu0 %34
    %38 = vset.pattern.permute.xlu0 0
    %39 = vperm.xlu0 %38, %v31
    %v40 = vpop.permute.xlu0 %39
    %v42 = vmul.f32 %v28, %v35
    %v43 = vmul.f32 %v29, %v40
    %vm44 = vcmask 1043456
    %v45 = vsel %vm44, %v42, 0.0
    %v46 = vrot.slane %v45, 4
    %v47 = vadd.f32 %v45, %v46
    %v48 = vrot.slane %v47, 2
    %v49 = vadd.f32 %v47, %v48
    %v50 = vrot.slane %v49, 1
    %v51 = vadd.f32 %v49, %v50
    %v52 = vsel %vm44, %v43, 0.0
    %v53 = vrot.slane %v52, 4
    %v54 = vadd.f32 %v52, %v53
    %v55 = vrot.slane %v54, 2
    %v56 = vadd.f32 %v54, %v55
    %v57 = vrot.slane %v56, 1
    %v58 = vadd.f32 %v56, %v57
    %v59 = vld [vmem:[#allocation2] sm:$0xff]
    %v60 = vld [vmem:[#allocation2 + $0x8] sm:$0xff]
    %v61 = vld [vmem:[#allocation2 + $0x10] sm:$0xff]
    %v62 = vld [vmem:[#allocation2 + $0x18] sm:$0xff]
    %v63 = vld [vmem:[#allocation2 + $0x20] sm:$0xff]
    %v64 = vld [vmem:[#allocation2 + $0x28] sm:$0xff]
    %v65 = vld [vmem:[#allocation2 + $0x30] sm:$0xff]
    %v66 = vld [vmem:[#allocation2 + $0x38] sm:$0xff]
    %v67 = vld [vmem:[#allocation2 + $0x40] sm:$0xff]
    %v68 = vld [vmem:[#allocation2 + $0x48] sm:$0xff]
    %v69 = vld [vmem:[#allocation2 + $0x50] sm:$0xff]
    %v70 = vld [vmem:[#allocation2 + $0x58] sm:$0xff]
    %v71 = vld [vmem:[#allocation2 + $0x60] sm:$0xff]
    %v72 = vld [vmem:[#allocation2 + $0x68] sm:$0xff]
    %v73 = vld [vmem:[#allocation2 + $0x70] sm:$0xff]
    %v74 = vld [vmem:[#allocation2 + $0x78] sm:$0xff]
    %v75 = vld [vmem:[#allocation2 + $0x80] sm:$0xff]
    %v76 = vld [vmem:[#allocation2 + $0x88] sm:$0xff]
    %v77 = vld [vmem:[#allocation2 + $0x90] sm:$0xff]
    %v78 = vld [vmem:[#allocation2 + $0x98] sm:$0xff]
    %v79 = vld [vmem:[#allocation2 + $0xa0] sm:$0xff]
    %v80 = vld [vmem:[#allocation2 + $0xa8] sm:$0xff]
    %v81 = vld [vmem:[#allocation2 + $0xb0] sm:$0xff]
    %v82 = vld [vmem:[#allocation2 + $0xb8] sm:$0xff]
    %v83 = vld [vmem:[#allocation2 + $0xc0] sm:$0xff]
    %v84 = vld [vmem:[#allocation2 + $0xc8] sm:$0xff]
    %v85 = vld [vmem:[#allocation2 + $0xd0] sm:$0xff]
    %v86 = vld [vmem:[#allocation2 + $0xd8] sm:$0xff]
    %v87 = vld [vmem:[#allocation2 + $0xe0] sm:$0xff]
    %v88 = vld [vmem:[#allocation2 + $0xe8] sm:$0xff]
    %v89 = vld [vmem:[#allocation2 + $0xf0] sm:$0xff]
    %v90 = vld [vmem:[#allocation2 + $0xf8] sm:$0xff]
    %vm93 = vcmask 1041409
    %v94 = vsel %vm93, %v58, %v51
    %96 = vmatprep.subr.mxu0 %v60
    %97 = vmatpush1.msra.mxu0 %v59
    %98 = vmatprep.subr.mxu0 %v62
    %99 = vmatpush1.msra.mxu0 %v61
    %100 = vmatprep.subr.mxu0 %v64
    %101 = vmatpush1.msra.mxu0 %v63
    %102 = vmatprep.subr.mxu0 %v66
    %103 = vmatpush1.msra.mxu0 %v65
    %104 = vmatprep.subr.mxu0 %v68
    %105 = vmatpush1.msra.mxu0 %v67
    %106 = vmatprep.subr.mxu0 %v70
    %107 = vmatpush1.msra.mxu0 %v69
    %108 = vmatprep.subr.mxu0 %v72
    %109 = vmatpush1.msra.mxu0 %v71
    %110 = vmatprep.subr.mxu0 %v74
    %111 = vmatpush1.msra.mxu0 %v73
    %112 = vmatprep.subr.mxu0 %v76
    %113 = vmatpush1.msra.mxu0 %v75
    %114 = vmatprep.subr.mxu0 %v78
    %115 = vmatpush1.msra.mxu0 %v77
    %116 = vmatprep.subr.mxu0 %v80
    %117 = vmatpush1.msra.mxu0 %v79
    %118 = vmatprep.subr.mxu0 %v82
    %119 = vmatpush1.msra.mxu0 %v81
    %120 = vmatprep.subr.mxu0 %v84
    %121 = vmatpush1.msra.mxu0 %v83
    %122 = vmatprep.subr.mxu0 %v86
    %123 = vmatpush1.msra.mxu0 %v85
    %124 = vmatprep.subr.mxu0 %v88
    %125 = vmatpush1.msra.mxu0 %v87
    %126 = vmatprep.subr.mxu0 %v90
    %127 = vmatpush1.msra.mxu0 %v89
    %128 = vmatprep.subr.mxu0 0.0
    %129 = vmatpush1.msra.mxu0 0.0
    %130 = vmatprep.subr.mxu0 0.0
    %131 = vmatpush1.msra.mxu0 0.0
    %132 = vmatprep.subr.mxu0 0.0
    %133 = vmatpush1.msra.mxu0 0.0
    %134 = vmatprep.subr.mxu0 0.0
    %135 = vmatpush1.msra.mxu0 0.0
    %136 = vmatprep.subr.mxu0 0.0
    %137 = vmatpush1.msra.mxu0 0.0
    %138 = vmatprep.subr.mxu0 0.0
    %139 = vmatpush1.msra.mxu0 0.0
    %140 = vmatprep.subr.mxu0 0.0
    %141 = vmatpush1.msra.mxu0 0.0
    %142 = vmatprep.subr.mxu0 0.0
    %143 = vmatpush1.msra.mxu0 0.0
    %144 = vmatprep.subr.mxu0 0.0
    %145 = vmatpush1.msra.mxu0 0.0
    %146 = vmatprep.subr.mxu0 0.0
    %147 = vmatpush1.msra.mxu0 0.0
    %148 = vmatprep.subr.mxu0 0.0
    %149 = vmatpush1.msra.mxu0 0.0
    %150 = vmatprep.subr.mxu0 0.0
    %151 = vmatpush1.msra.mxu0 0.0
    %152 = vmatprep.subr.mxu0 0.0
    %153 = vmatpush1.msra.mxu0 0.0
    %154 = vmatprep.subr.mxu0 0.0
    %155 = vmatpush1.msra.mxu0 0.0
    %156 = vmatprep.subr.mxu0 0.0
    %157 = vmatpush1.msra.mxu0 0.0
    %158 = vmatprep.subr.mxu0 0.0
    %159 = vmatpush1.msra.mxu0 0.0
    %160 = vmatprep.mubr.f32.mxu0 0.0
    %161 = vmatmul.mubr.f32.gmra.mrb[0].mxu0 %v94
    %v162 = vpop.f32.mrb[0].mxu0
    %v163 = vadd.f32 0.0, %v162
    %v164 = vpop.f32.mrb[0].mxu0
    %v165 = vadd.f32 0.0, %v164
    %166 = vdwg.mxu0
    %v169 = vcombine.low %v163, %v165
    %v171 = vunpack.c.l.s4 1983009808
    %v172 = vunpack.c.0.s8 %v171
    %v173 = vlaneseq
    %v174 = vshrl.u32 %v173, 7
    %v175 = vsub.s32 %v172, %v174
    %v176 = vrot.slane %v169, %v175
    %178 = vst [vmem:[%s3] sm:$0xf] %v176
    // Predicated region
    $region18: #{_lambda_.1} parent=1 // pred_check
      _
    $region19: #{_lambda_.1} parent=1 // pred_check_branch
      %180 = sbr.rel (0) target = $region21
    $region20: #{_lambda_.1} parent=1 // pred_region
      _
    $region21: #{_lambda_.1} parent=1 // pred_fallthru
      _
    // Predicated region
    $region22: #{_lambda_.1} parent=1 // pred_check
      _
    $region23: #{_lambda_.1} parent=1 // pred_check_branch
      %182 = sbr.rel (0) target = $region25
    $region24: #{_lambda_.1} parent=1 // pred_region
      _
    $region25: #{_lambda_.1} parent=1 // pred_fallthru
      _
    %183 = vsyncpa [#allocation3], 1

</llo_original>
